<compile_context>
chip_gen: v7x
topology: tpu7x:2x2x1
jax: 0.10.0
libtpu: 0.0.40
codegen_flags: <defaults>
</compile_context>

<pallas_src>
import functools

import jax
import jax.numpy as jnp
from jax.experimental import pallas as pl
from jax.experimental.pallas import tpu as pltpu


def _sublane_multiple(dtype) -> int:
    # Minimum second-minor tile granularity by element size.
    return {4: 8, 2: 16, 1: 32}.get(jnp.dtype(dtype).itemsize, 8)


def _pick_row_tile(n_rows, n_cols, x_dtype, t_dtype) -> int:
    """Largest row tile whose double-buffered input blocks fit the VMEM budget."""
    sub = max(_sublane_multiple(x_dtype), _sublane_multiple(t_dtype))
    bytes_per_row = n_cols * (
        jnp.dtype(x_dtype).itemsize + jnp.dtype(t_dtype).itemsize
    )
    # 2 pipeline buffers x (both inputs) x row_tile x C x itemsize <= 16 MiB.
    # Output blocks (8 x C x f32, double-buffered) are at most half of that, so
    # the total stays well inside the 32 MiB vmem_limit on all generations.
    budget = 16 * 1024 * 1024
    rt = budget // (2 * bytes_per_row)
    rt = min(rt, 1024)  # measured roofline saturation point for mem-bound tiles
    rows_padded = ((n_rows + sub - 1) // sub) * sub
    rt = min(rt, rows_padded)
    rt = max(sub, (rt // sub) * sub)
    return int(rt)


def _kl_loss_kernel(x_ref, t_ref, o_ref, *, inv_temp, n_rows, row_tile, mask_rows):
    """One grid step over a (row_tile, C) slab of rows.

    Mirrors PyTorch:
        p_in  = softmax(input  / T, dim=1)   # NOT log-softmax — module quirk
        p_tg  = softmax(target / T, dim=1)
        loss  = T*T * mean( p_tg * (log(p_tg) - p_in) )
    This step only writes per-lane partial sums; the wrapper finishes the mean.
    """
    x = x_ref[...].astype(jnp.float32) * inv_temp
    t = t_ref[...].astype(jnp.float32) * inv_temp

    # softmax(input): one exact reciprocal per row + per-element multiply.
    x = x - jnp.max(x, axis=-1, keepdims=True)
    ex = jnp.exp(x)
    p_in = ex * pl.reciprocal(jnp.sum(ex, axis=-1, keepdims=True), approx=False)

    # softmax(target) and its log via the log-sum-exp identity: no per-element
    # log and no log(0) -> NaN hazard (p_tg underflow gives 0 * finite = 0,
    # matching PyTorch's zeroing of target==0 entries).
    t = t - jnp.max(t, axis=-1, keepdims=True)
    et = jnp.exp(t)
    sum_et = jnp.sum(et, axis=-1, keepdims=True)
    p_tg = et * pl.reciprocal(sum_et, approx=False)
    log_p_tg = t - jnp.log(sum_et)

    kl = p_tg * (log_p_tg - p_in)

    if mask_rows:
        # Last block may read past row N; zero those rows (select, so any
        # garbage/NaN from the padded read region cannot propagate).
        row_ids = pl.program_id(0) * row_tile + jax.lax.broadcasted_iota(
            jnp.int32, (row_tile, 1), 0
        )
        kl = jnp.where(row_ids < n_rows, kl, 0.0)

    # Sublane-only reduction to (1, C), packed into a lane-dense (8, C) output
    # block (row 0 holds the partials, rows 1..7 are zero). The cross-lane
    # reduce happens once, in the wrapper.
    part = jnp.sum(kl, axis=0, keepdims=True)
    sub_id = jax.lax.broadcasted_iota(jnp.int32, (8, kl.shape[-1]), 0)
    o_ref[...] = jnp.where(sub_id == 0, part, 0.0)


def kl_loss_pallas(x, t, T=1.0, row_tile=None):
    """Pallas implementation of KLLoss.forward(input, target, T) for 2-D logits."""
    assert x.shape == t.shape and x.ndim == 2
    N, C = x.shape

    if row_tile is None:
        row_tile = _pick_row_tile(N, C, x.dtype, t.dtype)
    sub = max(_sublane_multiple(x.dtype), _sublane_multiple(t.dtype))
    assert row_tile % sub == 0, (row_tile, sub)

    num_blocks = pl.cdiv(N, row_tile)
    kernel = functools.partial(
        _kl_loss_kernel,
        inv_temp=1.0 / float(T),
        n_rows=N,
        row_tile=row_tile,
        mask_rows=(N % row_tile != 0),
    )

    bytes_in = N * C * (jnp.dtype(x.dtype).itemsize + jnp.dtype(t.dtype).itemsize)
    cost = pl.CostEstimate(
        flops=8 * N * C,
        transcendentals=2 * N * C,
        bytes_accessed=bytes_in + num_blocks * 8 * C * 4,
    )

    partials = pl.pallas_call(
        kernel,
        out_shape=jax.ShapeDtypeStruct((num_blocks * 8, C), jnp.float32),
        grid_spec=pltpu.PrefetchScalarGridSpec(
            num_scalar_prefetch=0,
            grid=(num_blocks,),
            in_specs=[
                pl.BlockSpec((row_tile, C), lambda i: (i, 0)),
                pl.BlockSpec((row_tile, C), lambda i: (i, 0)),
            ],
            out_specs=pl.BlockSpec((8, C), lambda i: (i, 0)),
        ),
        compiler_params=pltpu.CompilerParams(
            dimension_semantics=("parallel",),
            vmem_limit_bytes=32 * 1024 * 1024,
        ),
        cost_estimate=cost,
    )(x, t)

    scale = float(T) * float(T) / float(N * C)
    return scale * jnp.sum(partials)


def kl_loss_ref(x, t, T=1.0):
    """Pure-JAX reference mirroring the PyTorch module exactly."""
    p_in = jax.nn.softmax(x / T, axis=1)
    p_tg = jax.nn.softmax(t / T, axis=1)
    kl = p_tg * (jnp.log(p_tg) - p_in)
    return T * T * jnp.mean(kl)


if __name__ == "__main__":
    key = jax.random.PRNGKey(0)
    k1, k2, k3, k4 = jax.random.split(key, 4)

    # Small (batch, num_classes) shape consistent with the distillation loss.
    N, C = 16, 128
    T = 2.0
    x = jax.random.normal(k1, (N, C), dtype=jnp.float32)
    t = jax.random.normal(k2, (N, C), dtype=jnp.float32)
    out = jax.block_until_ready(kl_loss_pallas(x, t, T=T))
    ref = kl_loss_ref(x, t, T=T)
    assert jnp.allclose(out, ref, rtol=1e-5, atol=1e-6), (out, ref)

    # Also exercise the multi-block + tail-row-mask path (N % row_tile != 0).
    N2, C2 = 20, 128
    x2 = jax.random.normal(k3, (N2, C2), dtype=jnp.float32)
    t2 = jax.random.normal(k4, (N2, C2), dtype=jnp.float32)
    out2 = jax.block_until_ready(kl_loss_pallas(x2, t2, T=1.5, row_tile=8))
    ref2 = kl_loss_ref(x2, t2, T=1.5)
    assert jnp.allclose(out2, ref2, rtol=1e-5, atol=1e-6), (out2, ref2)

    print("KERNEL_OK")
</pallas_src>

<mosaic_0001>
module attributes {stable_mosaic.version = 11 : i64} {
  func.func @_kl_loss_kernel(%arg0: i32, %arg1: memref<16x128xf32, #tpu.memory_space<vmem>>, %arg2: memref<16x128xf32, #tpu.memory_space<vmem>>, %arg3: memref<8x128xf32, #tpu.memory_space<vmem>>) attributes {dimension_semantics = [#tpu.dimension_semantics<parallel>], iteration_bounds = array<i64: 1>, scalar_prefetch = 0 : i64, scratch_operands = 0 : i64, tpu.core_type = #tpu.core_type<tc>, window_params = [{transform_indices = @transform_0, window_bounds = array<i64: 16, 128>}, {transform_indices = @transform_1, window_bounds = array<i64: 16, 128>}, {transform_indices = @transform_2, window_bounds = array<i64: 8, 128>}]} {
    %c0 = arith.constant 0 : index
    %c0_0 = arith.constant 0 : index
    %0 = vector.load %arg1[%c0, %c0_0] : memref<16x128xf32, #tpu.memory_space<vmem>>, vector<16x128xf32>
    %cst = arith.constant 5.000000e-01 : f32
    %1 = vector.broadcast %cst : f32 to vector<16x128xf32>
    %2 = arith.mulf %0, %1 : vector<16x128xf32>
    %c0_1 = arith.constant 0 : index
    %c0_2 = arith.constant 0 : index
    %3 = vector.load %arg2[%c0_1, %c0_2] : memref<16x128xf32, #tpu.memory_space<vmem>>, vector<16x128xf32>
    %cst_3 = arith.constant 5.000000e-01 : f32
    %4 = vector.broadcast %cst_3 : f32 to vector<16x128xf32>
    %5 = arith.mulf %3, %4 : vector<16x128xf32>
    %cst_4 = arith.constant dense<0xFF800000> : vector<16xf32>
    %6 = vector.multi_reduction <maximumf>, %2, %cst_4 [1] : vector<16x128xf32> to vector<16xf32>
    %7 = vector.shape_cast %6 : vector<16xf32> to vector<16x1xf32>
    %8 = vector.broadcast %7 : vector<16x1xf32> to vector<16x128xf32>
    %9 = arith.subf %2, %8 : vector<16x128xf32>
    %10 = math.exp %9 : vector<16x128xf32>
    %cst_5 = arith.constant dense<0.000000e+00> : vector<16xf32>
    %11 = vector.multi_reduction <add>, %10, %cst_5 [1] : vector<16x128xf32> to vector<16xf32>
    %12 = vector.shape_cast %11 : vector<16xf32> to vector<16x1xf32>
    %13 = tpu.reciprocal %12 : vector<16x1xf32> -> vector<16x1xf32>
    %14 = vector.broadcast %13 : vector<16x1xf32> to vector<16x128xf32>
    %15 = arith.mulf %10, %14 : vector<16x128xf32>
    %cst_6 = arith.constant dense<0xFF800000> : vector<16xf32>
    %16 = vector.multi_reduction <maximumf>, %5, %cst_6 [1] : vector<16x128xf32> to vector<16xf32>
    %17 = vector.shape_cast %16 : vector<16xf32> to vector<16x1xf32>
    %18 = vector.broadcast %17 : vector<16x1xf32> to vector<16x128xf32>
    %19 = arith.subf %5, %18 : vector<16x128xf32>
    %20 = math.exp %19 : vector<16x128xf32>
    %cst_7 = arith.constant dense<0.000000e+00> : vector<16xf32>
    %21 = vector.multi_reduction <add>, %20, %cst_7 [1] : vector<16x128xf32> to vector<16xf32>
    %22 = vector.shape_cast %21 : vector<16xf32> to vector<16x1xf32>
    %23 = tpu.reciprocal %22 : vector<16x1xf32> -> vector<16x1xf32>
    %24 = vector.broadcast %23 : vector<16x1xf32> to vector<16x128xf32>
    %25 = arith.mulf %20, %24 : vector<16x128xf32>
    %26 = math.log %22 : vector<16x1xf32>
    %27 = vector.broadcast %26 : vector<16x1xf32> to vector<16x128xf32>
    %28 = arith.subf %19, %27 : vector<16x128xf32>
    %29 = arith.subf %28, %15 : vector<16x128xf32>
    %30 = arith.mulf %25, %29 : vector<16x128xf32>
    %cst_8 = arith.constant dense<0.000000e+00> : vector<128xf32>
    %31 = vector.multi_reduction <add>, %30, %cst_8 [0] : vector<16x128xf32> to vector<128xf32>
    %32 = vector.shape_cast %31 : vector<128xf32> to vector<1x128xf32>
    %33 = tpu.iota {dimensions = array<i32: 0>} : vector<8x128xi32>
    %c0_i32 = arith.constant 0 : i32
    %34 = vector.broadcast %c0_i32 : i32 to vector<8x128xi32>
    %35 = arith.cmpi eq, %33, %34 : vector<8x128xi32>
    %cst_9 = arith.constant 0.000000e+00 : f32
    %36 = vector.shape_cast %32 : vector<1x128xf32> to vector<1x128xf32>
    %37 = vector.broadcast %36 : vector<1x128xf32> to vector<8x128xf32>
    %38 = vector.broadcast %cst_9 : f32 to vector<8x128xf32>
    %39 = arith.select %35, %37, %38 : vector<8x128xi1>, vector<8x128xf32>
    %c0_10 = arith.constant 0 : index
    %c0_11 = arith.constant 0 : index
    %40 = vector.load %arg3[%c0_10, %c0_11] : memref<8x128xf32, #tpu.memory_space<vmem>>, vector<8x128xf32>
    tpu.vector_store %arg3[%c0_10, %c0_11], %39 {strides = array<i32>} : memref<8x128xf32, #tpu.memory_space<vmem>>, vector<8x128xf32>,
    return
  }
  func.func @transform_0(%arg0: i32) -> (i32, i32) {
    %c0_i32 = arith.constant 0 : i32
    %c0_i32_0 = arith.constant 0 : i32
    return %arg0, %c0_i32 : i32, i32
  }
  func.func @transform_1(%arg0: i32) -> (i32, i32) {
    %c0_i32 = arith.constant 0 : i32
    %c0_i32_0 = arith.constant 0 : i32
    return %arg0, %c0_i32 : i32, i32
  }
  func.func @transform_2(%arg0: i32) -> (i32, i32) {
    %c0_i32 = arith.constant 0 : i32
    %c0_i32_0 = arith.constant 0 : i32
    return %arg0, %c0_i32 : i32, i32
  }
}

</mosaic_0001>

<llo_original>
// kernel: tpu_custom_call.1
$region0: #{tpu_custom_call.1}
  #allocation0 [shape = 'u32[]', space=smem, size = 0x4, offset = 0x4, fixed_abs, tag = 'smem constant byte address 0x4 - core index']
  #allocation1 [shape = 'u32[144,128]{1,0:T(1,128)}', space=vmem, size = 0x12000, scoped, tag = 'internal scratch']
  %s0 = inlined_call_operand.hbm [shape: f32[16,128], index: 0, kind: input, shape index: {}]
  %s1 = inlined_call_operand.hbm [shape: f32[16,128], index: 1, kind: input, shape index: {}]
  %s2 = inlined_call_operand.hbm [shape: f32[8,128], index: 2, kind: output, shape index: {}]
  %s3 = sld [smem:[#allocation0]]
  $region26: #{tpu_custom_call.1} parent=0
    _
  %s5 = ssub.s32 1, %s3
  %s6 = scalar_select 0, %s5, %s3
  $region1: #{tpu_custom_call.1} parent=0
    #allocation2 [shape = 'u8[8192]{0}', space=vmem, size = 0x2000, scoped, tag = 'input window, operand 0, single buffered']
    #allocation3 [shape = 's32[1]{0}', space=sflag, size = 0x4, scoped, tag = 'scoped memory for tpu_custom_call.1']
    #allocation4 [shape = 's32[1]{0}', space=sflag, size = 0x4, scoped, tag = 'scoped memory for tpu_custom_call.1']
    #allocation5 [shape = 'u8[8192]{0}', space=vmem, size = 0x2000, scoped, tag = 'input window, operand 1, single buffered']
    #allocation6 [shape = 's32[1]{0}', space=sflag, size = 0x4, scoped, tag = 'scoped memory for tpu_custom_call.1']
    #allocation7 [shape = 'u8[4096]{0}', space=vmem, size = 0x1000, scoped, tag = 'output window, operand 0, single buffered']
    %7 = vsyncpa [#allocation3], 0
    %8 = vsyncpa [#allocation6], 0
    %9 = vsyncpa [#allocation4], 0
    // Predicated region
    $region2: #{tpu_custom_call.1} parent=1 // pred_check
      _
    $region3: #{tpu_custom_call.1} parent=1 // pred_check_branch
      %11 = sbr.rel (0) target = $region5
    $region4: #{tpu_custom_call.1} parent=1 // pred_region
      %s13 = ssub.s32 256, 256
      %14 = vsyncadd [#allocation3], %s13
      %s15 = sshll.u32 [#allocation2], 4
      %s16 = int_to_ptr.vmem [resolvable:$true] %s15
      %21 = dma.hbm_to_vmem [thread:$0]  %s0, 256, %s16, [#allocation3], 128, 128, 8
    $region5: #{tpu_custom_call.1} parent=1 // pred_fallthru
      _
    // Predicated region
    $region6: #{tpu_custom_call.1} parent=1 // pred_check
      _
    $region7: #{tpu_custom_call.1} parent=1 // pred_check_branch
      %23 = sbr.rel (0) target = $region9
    $region8: #{tpu_custom_call.1} parent=1 // pred_region
      %s25 = ssub.s32 256, 256
      %26 = vsyncadd [#allocation6], %s25
      %s27 = sshll.u32 [#allocation5], 4
      %s28 = int_to_ptr.vmem [resolvable:$true] %s27
      %33 = dma.hbm_to_vmem [thread:$0]  %s1, 256, %s28, [#allocation6], 128, 128, 8
    $region9: #{tpu_custom_call.1} parent=1 // pred_fallthru
      _
    // Predicated region
    $region10: #{tpu_custom_call.1} parent=1 // pred_check
      _
    $region11: #{tpu_custom_call.1} parent=1 // pred_check_branch
      %35 = sbr.rel (0) target = $region13
    $region12: #{tpu_custom_call.1} parent=1 // pred_region
      %36 = dma.done [#allocation3], 256
    $region13: #{tpu_custom_call.1} parent=1 // pred_fallthru
      _
    // Predicated region
    $region14: #{tpu_custom_call.1} parent=1 // pred_check
      _
    $region15: #{tpu_custom_call.1} parent=1 // pred_check_branch
      %38 = sbr.rel (0) target = $region17
    $region16: #{tpu_custom_call.1} parent=1 // pred_region
      %39 = dma.done [#allocation6], 256
    $region17: #{tpu_custom_call.1} parent=1 // pred_fallthru
      _
    %v40 = vld [vmem:[#allocation2] sm:$0xff]
    %v41 = vld [vmem:[#allocation2 + $0x8] sm:$0xff]
    %v42 = vmul.f32 %v40, 0.5
    %v43 = vmul.f32 %v41, 0.5
    %v44 = vld [vmem:[#allocation5] sm:$0xff]
    %v45 = vld [vmem:[#allocation5 + $0x8] sm:$0xff]
    %v46 = vmul.f32 %v44, 0.5
    %v47 = vmul.f32 %v45, 0.5
    %48 = vmax.xlane.f32.xlu0 %v42
    %v49 = vpop.xlane.xlu0 %48
    %50 = vmax.xlane.f32.xlu0 %v43
    %v51 = vpop.xlane.xlu0 %50
    %v52 = vsub.f32 %v42, %v49
    %v53 = vsub.f32 %v43, %v51
    %v54 = vmul.f32 %v52, 1.442695
    %v55 = vpow.pop %v54
    %v56 = vmul.f32 %v53, 1.442695
    %v57 = vpow.pop %v56
    %58 = vadd.xlane.f32.xlu0 %v55
    %v59 = vpop.xlane.xlu0 %58
    %60 = vadd.xlane.f32.xlu0 %v57
    %v61 = vpop.xlane.xlu0 %60
    %v62 = vrcp.pop %v59
    %v63 = vrcp.pop %v61
    %v64 = vmul.f32 %v55, %v62
    %v65 = vmul.f32 %v57, %v63
    %66 = vmax.xlane.f32.xlu0 %v46
    %v67 = vpop.xlane.xlu0 %66
    %68 = vmax.xlane.f32.xlu0 %v47
    %v69 = vpop.xlane.xlu0 %68
    %v70 = vsub.f32 %v46, %v67
    %v71 = vsub.f32 %v47, %v69
    %v72 = vmul.f32 %v70, 1.442695
    %v73 = vpow.pop %v72
    %v74 = vmul.f32 %v71, 1.442695
    %v75 = vpow.pop %v74
    %76 = vadd.xlane.f32.xlu0 %v73
    %v77 = vpop.xlane.xlu0 %76
    %78 = vadd.xlane.f32.xlu0 %v75
    %v79 = vpop.xlane.xlu0 %78
    %v80 = vrcp.pop %v77
    %v81 = vrcp.pop %v79
    %v82 = vmul.f32 %v73, %v80
    %v83 = vmul.f32 %v75, %v81
    %v84 = vlog2.pop %v77
    %v85 = vmul.f32 %v84, 0.6931472
    %v86 = vlog2.pop %v79
    %v87 = vmul.f32 %v86, 0.6931472
    %v88 = vsub.f32 %v70, %v85
    %v89 = vsub.f32 %v71, %v87
    %v90 = vsub.f32 %v88, %v64
    %v91 = vsub.f32 %v89, %v65
    %v92 = vmul.f32 %v82, %v90
    %v93 = vmul.f32 %v83, %v91
    %v94 = vadd.f32 %v92, %v93
    %v95 = vrot.slane %v94, 4
    %v96 = vadd.f32 %v94, %v95
    %v97 = vrot.slane %v96, 2
    %v98 = vadd.f32 %v96, %v97
    %v99 = vrot.slane %v98, 1
    %v100 = vadd.f32 %v98, %v99
    %v101 = vlaneseq
    %v102 = vshrl.u32 %v101, 7
    %vm103 = vcmp.eq.s32.totalorder %v102, 0
    %v104 = vsel %vm103, %v100, 0.0
    %105 = vst [vmem:[#allocation7] sm:$0xff] %v104
    // Predicated region
    $region18: #{tpu_custom_call.1} parent=1 // pred_check
      _
    $region19: #{tpu_custom_call.1} parent=1 // pred_check_branch
      %107 = sbr.rel (0) target = $region21
    $region20: #{tpu_custom_call.1} parent=1 // pred_region
      %s109 = ssub.s32 128, 128
      %110 = vsyncadd [#allocation4], %s109
      %s112 = sshll.u32 [#allocation7], 4
      %s113 = int_to_ptr.vmem [resolvable:$true] %s112
      %115 = dma.vmem_to_hbm [thread:$0]  %s113, 128, %s2, [#allocation4]
    $region21: #{tpu_custom_call.1} parent=1 // pred_fallthru
      _
    // Predicated region
    $region22: #{tpu_custom_call.1} parent=1 // pred_check
      _
    $region23: #{tpu_custom_call.1} parent=1 // pred_check_branch
      %117 = sbr.rel (0) target = $region25
    $region24: #{tpu_custom_call.1} parent=1 // pred_region
      %118 = dma.done [#allocation4], 128
    $region25: #{tpu_custom_call.1} parent=1 // pred_fallthru
      _
    %119 = vsyncpa [#allocation3], 1
    %120 = vsyncpa [#allocation6], 1
    %121 = vsyncpa [#allocation4], 1

</llo_original>
